<compile_context>
chip_gen: v7x
topology: tpu7x:2x2x1
jax: 0.10.0
libtpu: 0.0.40
codegen_flags: <defaults>
</compile_context>

<pallas_src>
import functools

import jax
import jax.numpy as jnp
from jax.experimental import pallas as pl
from jax.experimental.pallas import tpu as pltpu


def _round_up(x, m):
    return (x + m - 1) // m * m


def _conv_fused_kernel(p_ref, w_ref, b_ref, o_ref):
    """One grid step = (batch element, spatial tile).

    p_ref: (1, TM, K)        im2col patch tile, K = KH*KW*Cin (bf16)
    w_ref: (K, COUT_PAD)     fused weight matrix (bf16), constant across grid
    b_ref: (1, COUT_PAD)     bias (f32), constant across grid
    o_ref: (1, TM, COUT_PAD) output tile (f32)
    """
    acc = jnp.dot(p_ref[0], w_ref[...], preferred_element_type=jnp.float32)
    o_ref[0] = (acc + b_ref[...]).astype(o_ref.dtype)


def _im2col_fused(x_nhwc, kernel_size, stride, padding):
    """Plain-JAX glue: pad and extract strided per-tap windows, fused on the
    channel axis so the kernel contraction is a single matmul.

    Returns (N, Ho*Wo, KH*KW*Cin), Ho, Wo. Column order is tap-major
    (t = ky*K + kx, then Cin), matching the OIHW weight reshape below.
    """
    n, h, w, c = x_nhwc.shape
    k = kernel_size
    ho = (h + 2 * padding - k) // stride + 1
    wo = (w + 2 * padding - k) // stride + 1
    xp = jnp.pad(x_nhwc, ((0, 0), (padding, padding), (padding, padding), (0, 0)))
    cols = []
    for ky in range(k):
        for kx in range(k):
            sl = xp[
                :,
                ky : ky + stride * (ho - 1) + 1 : stride,
                kx : kx + stride * (wo - 1) + 1 : stride,
                :,
            ]
            cols.append(sl.reshape(n, ho * wo, c))
    return jnp.concatenate(cols, axis=-1), ho, wo


@functools.partial(jax.jit, static_argnames=("stride", "padding"))
def numba_conv2d_forward(x_nchw, weight_oihw, bias, stride, padding):
    """Forward pass matching NumbaConv2d: x NCHW, weight OIHW, bias (Cout,)."""
    n, cin, h, w = x_nchw.shape
    cout, cin_w, kh, kw = weight_oihw.shape
    assert cin == cin_w and kh == kw
    k = kh

    x_nhwc = jnp.transpose(x_nchw, (0, 2, 3, 1))
    patches, ho, wo = _im2col_fused(x_nhwc, k, stride, padding)  # (N, HoWo, K*K*Cin)
    howo = ho * wo
    k_dim = k * k * cin

    # Spatial (M) tiling: multiple of 8 sublanes, capped at 256 rows per block.
    tm = min(256, _round_up(howo, 8))
    howo_pad = _round_up(howo, tm)
    # Lane-dense output: pad Cout to a multiple of 128.
    cout_pad = _round_up(cout, 128)

    patches = jnp.pad(patches, ((0, 0), (0, howo_pad - howo), (0, 0)))
    patches = patches.astype(jnp.bfloat16)

    # OIHW -> (KH, KW, Cin, Cout) -> (KH*KW*Cin, Cout), tap-major to match patches.
    w_fused = jnp.transpose(weight_oihw, (2, 3, 1, 0)).reshape(k_dim, cout)
    w_fused = jnp.pad(w_fused, ((0, 0), (0, cout_pad - cout))).astype(jnp.bfloat16)
    b2 = jnp.pad(bias.astype(jnp.float32), (0, cout_pad - cout)).reshape(1, cout_pad)

    out = pl.pallas_call(
        _conv_fused_kernel,
        out_shape=jax.ShapeDtypeStruct((n, howo_pad, cout_pad), jnp.float32),
        grid_spec=pltpu.PrefetchScalarGridSpec(
            num_scalar_prefetch=0,
            grid=(n, howo_pad // tm),
            in_specs=[
                pl.BlockSpec((1, tm, k_dim), lambda b, m: (b, m, 0)),
                pl.BlockSpec((k_dim, cout_pad), lambda b, m: (0, 0)),
                pl.BlockSpec((1, cout_pad), lambda b, m: (0, 0)),
            ],
            out_specs=pl.BlockSpec((1, tm, cout_pad), lambda b, m: (b, m, 0)),
        ),
        compiler_params=pltpu.CompilerParams(
            dimension_semantics=("parallel", "parallel"),
            vmem_limit_bytes=32 * 1024 * 1024,
        ),
    )(patches, w_fused, b2)

    # (N, HoWo_pad, Cout_pad) -> slice real extents -> NCHW.
    out = out[:, :howo, :cout].reshape(n, ho, wo, cout)
    return jnp.transpose(out, (0, 3, 1, 2))


if __name__ == "__main__":
    # Module hyperparameters (small, consistent with the PyTorch module).
    batch, in_channels, out_channels = 2, 4, 8
    kernel_size, padding, stride = 3, 1, 2
    height = width = 16

    key = jax.random.PRNGKey(0)
    kx, kw = jax.random.split(key)

    x = jax.random.normal(kx, (batch, in_channels, height, width), dtype=jnp.float32)
    # NumbaConv2d.__init__: weight ~ randn(O, I, K, K), bias = zeros(O).
    weight = jax.random.normal(
        kw, (out_channels, in_channels, kernel_size, kernel_size), dtype=jnp.float32
    )
    bias = jnp.zeros((out_channels,), dtype=jnp.float32)

    out = numba_conv2d_forward(x, weight, bias, stride, padding)
    out = jax.block_until_ready(out)

    # Reference check: same bf16 input rounding as the kernel path, f32 math.
    xr = x.astype(jnp.bfloat16).astype(jnp.float32)
    wr = weight.astype(jnp.bfloat16).astype(jnp.float32)
    ref = jax.lax.conv_general_dilated(
        xr,
        wr,
        window_strides=(stride, stride),
        padding=[(padding, padding), (padding, padding)],
        dimension_numbers=("NCHW", "OIHW", "NCHW"),
        precision=jax.lax.Precision.HIGHEST,
    ) + bias[None, :, None, None]

    assert out.shape == ref.shape
    assert jnp.allclose(out, ref, atol=1e-3, rtol=1e-3)

    print("KERNEL_OK")
</pallas_src>

<mosaic_0001>
module attributes {stable_mosaic.version = 11 : i64} {
  func.func @_conv_fused_kernel(%arg0: i32, %arg1: i32, %arg2: memref<1x64x36xbf16, #tpu.memory_space<vmem>>, %arg3: memref<36x128xbf16, #tpu.memory_space<vmem>>, %arg4: memref<1x128xf32, #tpu.memory_space<vmem>>, %arg5: memref<1x64x128xf32, #tpu.memory_space<vmem>>) attributes {dimension_semantics = [#tpu.dimension_semantics<parallel>, #tpu.dimension_semantics<parallel>], iteration_bounds = array<i64: 2, 1>, scalar_prefetch = 0 : i64, scratch_operands = 0 : i64, tpu.core_type = #tpu.core_type<tc>, window_params = [{transform_indices = @transform_0, window_bounds = array<i64: 1, 64, 36>}, {pipeline_mode = #tpu.pipeline_mode<synchronous>, transform_indices = @transform_1, window_bounds = array<i64: 36, 128>}, {pipeline_mode = #tpu.pipeline_mode<synchronous>, transform_indices = @transform_2, window_bounds = array<i64: 1, 128>}, {transform_indices = @transform_3, window_bounds = array<i64: 1, 64, 128>}]} {
    %c0 = arith.constant 0 : index
    %c0_0 = arith.constant 0 : index
    %c0_1 = arith.constant 0 : index
    %0 = vector.load %arg2[%c0, %c0_0, %c0_1] : memref<1x64x36xbf16, #tpu.memory_space<vmem>>, vector<1x64x36xbf16>
    %1 = vector.shape_cast %0 : vector<1x64x36xbf16> to vector<64x36xbf16>
    %c0_2 = arith.constant 0 : index
    %c0_3 = arith.constant 0 : index
    %2 = vector.load %arg3[%c0_2, %c0_3] : memref<36x128xbf16, #tpu.memory_space<vmem>>, vector<36x128xbf16>
    %cst = arith.constant dense<0.000000e+00> : vector<64x128xf32>
    %3 = tpu.matmul %1, %2, %cst {dimension_numbers = #tpu.dot_dimension_numbers<[1], [0], [0], [1], [0, 0, 1, 1], [], []>} : vector<64x36xbf16>, vector<36x128xbf16>, vector<64x128xf32> -> vector<64x128xf32>
    %c0_4 = arith.constant 0 : index
    %c0_5 = arith.constant 0 : index
    %4 = vector.load %arg4[%c0_4, %c0_5] : memref<1x128xf32, #tpu.memory_space<vmem>>, vector<1x128xf32>
    %5 = vector.broadcast %4 : vector<1x128xf32> to vector<64x128xf32>
    %6 = arith.addf %3, %5 : vector<64x128xf32>
    %c0_6 = arith.constant 0 : index
    %c0_7 = arith.constant 0 : index
    %c0_8 = arith.constant 0 : index
    %7 = vector.load %arg5[%c0_6, %c0_7, %c0_8] : memref<1x64x128xf32, #tpu.memory_space<vmem>>, vector<1x64x128xf32>
    %8 = vector.shape_cast %7 : vector<1x64x128xf32> to vector<64x128xf32>
    %9 = vector.shape_cast %6 : vector<64x128xf32> to vector<1x64x128xf32>
    tpu.vector_store %arg5[%c0_6, %c0_7, %c0_8], %9 {strides = array<i32>} : memref<1x64x128xf32, #tpu.memory_space<vmem>>, vector<1x64x128xf32>,
    return
  }
  func.func @transform_0(%arg0: i32, %arg1: i32) -> (i32, i32, i32) {
    %c0_i32 = arith.constant 0 : i32
    %c0_i32_0 = arith.constant 0 : i32
    return %arg0, %arg1, %c0_i32 : i32, i32, i32
  }
  func.func @transform_1(%arg0: i32, %arg1: i32) -> (i32, i32) {
    %c0_i32 = arith.constant 0 : i32
    %c0_i32_0 = arith.constant 0 : i32
    %c0_i32_1 = arith.constant 0 : i32
    return %c0_i32, %c0_i32_0 : i32, i32
  }
  func.func @transform_2(%arg0: i32, %arg1: i32) -> (i32, i32) {
    %c0_i32 = arith.constant 0 : i32
    %c0_i32_0 = arith.constant 0 : i32
    %c0_i32_1 = arith.constant 0 : i32
    return %c0_i32, %c0_i32_0 : i32, i32
  }
  func.func @transform_3(%arg0: i32, %arg1: i32) -> (i32, i32, i32) {
    %c0_i32 = arith.constant 0 : i32
    %c0_i32_0 = arith.constant 0 : i32
    return %arg0, %arg1, %c0_i32 : i32, i32, i32
  }
}

</mosaic_0001>

<llo_original>
// kernel: numba_conv2d_forward.1
$region0: #{numba_conv2d_forward.1}
  #allocation0 [shape = 'u32[]', space=smem, size = 0x4, offset = 0x4, fixed_abs, tag = 'smem constant byte address 0x4 - core index']
  #allocation1 [shape = 'u32[144,128]{1,0:T(1,128)}', space=vmem, size = 0x12000, scoped, tag = 'internal scratch']
  %s0 = inlined_call_operand.vmem [shape: bf16[2,64,36], index: 0, kind: input, shape index: {}]
  %s1 = inlined_call_operand.vmem [shape: bf16[36,128], index: 1, kind: input, shape index: {}]
  %s2 = inlined_call_operand.vmem [shape: f32[1,128], index: 2, kind: input, shape index: {}]
  %s3 = inlined_call_operand.vmem [shape: f32[2,64,128], index: 3, kind: output, shape index: {}]
  %s4 = sld [smem:[#allocation0]]
  $region45: #{numba_conv2d_forward.1} parent=0
    _
  %s6 = ssub.s32 1, %s4
  %s7 = scalar_select 0, %s6, %s4
  loop: start=0, step=1, limit=4
  $region2: #{numba_conv2d_forward.1} parent=0 // loop_pre_header
    _
  $region3: #{numba_conv2d_forward.1} parent=0 // loop_header
    %s9 = sphi 0, %s13
    %p10 = scmp.ge.s32.totalorder %s9, 4
    %s16 = sphi 0, %s28
    %s17 = sphi 0, %s24
    %s18 = sphi 0, %s16
    %s19 = sphi 0, %s17
    %s20 = sphi 0, %s18
    %s21 = sphi 0, %s19
    %s33 = sphi 0, %s35
    %s36 = sphi 0, %s33
    %s37 = sphi 0, %s36
    %s53 = sphi 0, %s37
    %s57 = sphi 0, %s57
    %s59 = sphi 0, %s57
    %s60 = sphi 0, %s59
    %s74 = sphi 0, %s60
    %s78 = sphi 0, %s78
    %s80 = sphi 0, %s78
    %s81 = sphi 0, %s80
    %s95 = sphi 0, %s81
    %s103 = sphi 0, %s105
    %s106 = sphi 0, %s103
    %s107 = sphi 0, %s106
    %s123 = sphi 0, %s107
  $region4: #{numba_conv2d_forward.1} parent=0 // loop_header_branch
    %12 = sbr.rel (%p10) target = $region8
  $region5: #{numba_conv2d_forward.1} parent=0 // loop_body
    %s14 = ssub.s32 %s9, 1
    %s15 = ssub.s32 %s9, 2
    %s22 = sadd.s32 1, %s17
    %p23 = scmp.ge.s32.totalorder %s22, 1
    %s24 = scalar_select %p23, 0, %s22
    %s25 = sadd.s32 1, %s16
    %s26 = scalar_select %p23, %s25, %s16
    %p27 = scmp.ge.s32.totalorder %s26, 2
    %s28 = scalar_select %p27, 0, %s26
    %s29 = ssub.s32 %s16, %s28
    %s30 = ssub.s32 %s17, %s24
    %s31 = sor.u32 %s29, %s30
    %p32 = scmp.eq.s32.totalorder %s31, 0
    %s34 = sadd.s32 %s33, 1
    %s35 = scalar_select %p32, %s33, %s34
    %p38 = pneg %p32
    %p39 = scmp.eq.s32.totalorder %s9, 1
    %p40 = por %p38, %p39
    %p41 = scmp.ne.s32.totalorder %s33, %s36
    %p42 = scmp.eq.s32.totalorder %s9, 0
    %p43 = por %p41, %p42
    %p44 = scmp.ne.s32.totalorder %s33, %s36
    %p45 = scmp.eq.s32.totalorder %s14, 1
    %p46 = por %p44, %p45
    %p47 = scmp.ne.s32.totalorder %s36, %s37
    %p48 = scmp.eq.s32.totalorder %s14, 0
    %p49 = por %p47, %p48
    %p50 = scmp.ne.s32.totalorder %s36, %s37
    %p51 = scmp.eq.s32.totalorder %s15, 1
    %p52 = por %p50, %p51
    %p54 = scmp.ne.s32.totalorder %s37, %s53
    %p55 = scmp.eq.s32.totalorder %s15, 0
    %p56 = por %p54, %p55
    %s58 = sadd.s32 %s57, 1
    %p61 = scmp.eq.s32.totalorder %s9, 1
    %p62 = scmp.ne.s32.totalorder %s57, %s59
    %p63 = scmp.eq.s32.totalorder %s9, 0
    %p64 = por %p62, %p63
    %p65 = scmp.ne.s32.totalorder %s57, %s59
    %p66 = scmp.eq.s32.totalorder %s14, 1
    %p67 = por %p65, %p66
    %p68 = scmp.ne.s32.totalorder %s59, %s60
    %p69 = scmp.eq.s32.totalorder %s14, 0
    %p70 = por %p68, %p69
    %p71 = scmp.ne.s32.totalorder %s59, %s60
    %p72 = scmp.eq.s32.totalorder %s15, 1
    %p73 = por %p71, %p72
    %p75 = scmp.ne.s32.totalorder %s60, %s74
    %p76 = scmp.eq.s32.totalorder %s15, 0
    %p77 = por %p75, %p76
    %s79 = sadd.s32 %s78, 1
    %p82 = scmp.eq.s32.totalorder %s9, 1
    %p83 = scmp.ne.s32.totalorder %s78, %s80
    %p84 = scmp.eq.s32.totalorder %s9, 0
    %p85 = por %p83, %p84
    %p86 = scmp.ne.s32.totalorder %s78, %s80
    %p87 = scmp.eq.s32.totalorder %s14, 1
    %p88 = por %p86, %p87
    %p89 = scmp.ne.s32.totalorder %s80, %s81
    %p90 = scmp.eq.s32.totalorder %s14, 0
    %p91 = por %p89, %p90
    %p92 = scmp.ne.s32.totalorder %s80, %s81
    %p93 = scmp.eq.s32.totalorder %s15, 1
    %p94 = por %p92, %p93
    %p96 = scmp.ne.s32.totalorder %s81, %s95
    %p97 = scmp.eq.s32.totalorder %s15, 0
    %p98 = por %p96, %p97
    %s99 = ssub.s32 %s16, %s28
    %s100 = ssub.s32 %s17, %s24
    %s101 = sor.u32 %s99, %s100
    %p102 = scmp.eq.s32.totalorder %s101, 0
    %s104 = sadd.s32 %s103, 1
    %s105 = scalar_select %p102, %s103, %s104
    %p108 = pneg %p102
    %p109 = scmp.eq.s32.totalorder %s9, 1
    %p110 = por %p108, %p109
    %p111 = scmp.ne.s32.totalorder %s103, %s106
    %p112 = scmp.eq.s32.totalorder %s9, 0
    %p113 = por %p111, %p112
    %p114 = scmp.ne.s32.totalorder %s103, %s106
    %p115 = scmp.eq.s32.totalorder %s14, 1
    %p116 = por %p114, %p115
    %p117 = scmp.ne.s32.totalorder %s106, %s107
    %p118 = scmp.eq.s32.totalorder %s14, 0
    %p119 = por %p117, %p118
    %p120 = scmp.ne.s32.totalorder %s106, %s107
    %p121 = scmp.eq.s32.totalorder %s15, 1
    %p122 = por %p120, %p121
    %p124 = scmp.ne.s32.totalorder %s107, %s123
    %p125 = scmp.eq.s32.totalorder %s15, 0
    %p126 = por %p124, %p125
    %p127 = scmp.le.s32.totalorder 1, %s9
    %p128 = scmp.lt.s32.totalorder %s9, 3
    %p129 = pnand %p127, %p128
    %p130 = pneg %p129
    // Predicated region
    $region9: #{numba_conv2d_forward.1} parent=5 // pred_check
      _
    $region10: #{numba_conv2d_forward.1} parent=5 // pred_check_branch
      %132 = sbr.rel (%p129) target = $region12
    $region11: #{numba_conv2d_forward.1} parent=5 // pred_region
      %s133 = ssub.s32 %s9, 1
      // Predicated region
      $region13: #{numba_conv2d_forward.1} parent=11 // pred_check
        %p134 = pneg %p70
      $region14: #{numba_conv2d_forward.1} parent=11 // pred_check_branch
        %136 = sbr.rel (%p134) target = $region16
      $region15: #{numba_conv2d_forward.1} parent=11 // pred_region
        _
      $region16: #{numba_conv2d_forward.1} parent=11 // pred_fallthru
        _
      // Predicated region
      $region17: #{numba_conv2d_forward.1} parent=11 // pred_check
        %p137 = pneg %p91
      $region18: #{numba_conv2d_forward.1} parent=11 // pred_check_branch
        %139 = sbr.rel (%p137) target = $region20
      $region19: #{numba_conv2d_forward.1} parent=11 // pred_region
        _
      $region20: #{numba_conv2d_forward.1} parent=11 // pred_fallthru
        _
    $region12: #{numba_conv2d_forward.1} parent=5 // pred_fallthru
      _
    %p140 = scmp.lt.s32.totalorder %s9, 2
    // Predicated region
    $region21: #{numba_conv2d_forward.1} parent=5 // pred_check
      %p141 = pneg %p140
    $region22: #{numba_conv2d_forward.1} parent=5 // pred_check_branch
      %143 = sbr.rel (%p141) target = $region24
    $region23: #{numba_conv2d_forward.1} parent=5 // pred_region
      // Predicated region
      $region25: #{numba_conv2d_forward.1} parent=23 // pred_check
        %p144 = pneg %p43
      $region26: #{numba_conv2d_forward.1} parent=23 // pred_check_branch
        %146 = sbr.rel (%p144) target = $region28
      $region27: #{numba_conv2d_forward.1} parent=23 // pred_region
        %s147 = smul.u32 8, %s17
        %p148 = scmp.lt.s32.totalorder %s16, 1
        %s149 = scalar_select %p148, %s16, 1
        %p150 = scmp.lt.s32.totalorder %s147, 7
        %s151 = scalar_select %p150, %s147, 7
        %s152 = smul.addr %s149, 8
        %s153 = sadd.s32 %s151, %s152
        %s154 = smul.addr %s153, 4
        %s155 = scalar_lea.vmem %s0, %s154
        %s156 = smul.u32 8, %s17
      $region28: #{numba_conv2d_forward.1} parent=23 // pred_fallthru
        _
    $region24: #{numba_conv2d_forward.1} parent=5 // pred_fallthru
      _
    %p157 = scmp.le.s32.totalorder 1, %s9
    %p158 = scmp.lt.s32.totalorder %s9, 3
    %p159 = pnand %p157, %p158
    %p160 = pneg %p159
    // Predicated region
    $region29: #{numba_conv2d_forward.1} parent=5 // pred_check
      _
    $region30: #{numba_conv2d_forward.1} parent=5 // pred_check_branch
      %162 = sbr.rel (%p159) target = $region32
    $region31: #{numba_conv2d_forward.1} parent=5 // pred_region
      %s163 = ssub.s32 %s9, 1
      %s164 = smul.u32 8, %s19
      %p165 = scmp.lt.s32.totalorder %s18, 1
      %s166 = scalar_select %p165, %s18, 1
      %p167 = scmp.lt.s32.totalorder %s164, 7
      %s168 = scalar_select %p167, %s164, 7
      %s169 = smul.addr %s166, 8
      %s170 = sadd.s32 %s168, %s169
      %s171 = smul.addr %s170, 4
      %s172 = scalar_lea.vmem %s0, %s171
      %p173 = pneg %p49
      %p174 = pneg %p46
      %p175 = pneg %p70
      %p176 = pneg %p67
      %p177 = pneg %p91
      %p178 = pneg %p88
      %p179 = pneg %p119
      %p180 = pneg %p116
      %s181 = smul.u32 8, %s19
      %p182 = scmp.lt.s32.totalorder %s18, 1
      %s183 = scalar_select %p182, %s18, 1
      %p184 = scmp.lt.s32.totalorder %s181, 7
      %s185 = scalar_select %p184, %s181, 7
      %s186 = smul.addr %s183, 8
      %s187 = sadd.s32 %s185, %s186
      %s188 = smul.addr %s187, 8
      %s189 = scalar_lea.vmem %s3, %s188
      %s190 = smul.u32 8, %s19
      %p191 = scmp.lt.s32.totalorder %s18, 1
      %s192 = scalar_select %p191, %s18, 1
      %p193 = scmp.lt.s32.totalorder %s190, 7
      %s194 = scalar_select %p193, %s190, 7
      %s195 = smul.addr %s192, 8
      %s196 = sadd.s32 %s194, %s195
      %s197 = smul.addr %s196, 4
      %s198 = scalar_lea.vmem %s0, %s197
      %s199 = smul.u32 8, %s19
      %s200 = smul.u32 8, %s19
      %p201 = scmp.lt.s32.totalorder %s18, 1
      %s202 = scalar_select %p201, %s18, 1
      %p203 = scmp.lt.s32.totalorder %s200, 7
      %s204 = scalar_select %p203, %s200, 7
      %s205 = smul.addr %s202, 8
      %s206 = sadd.s32 %s204, %s205
      %s207 = smul.addr %s206, 8
      %s208 = scalar_lea.vmem %s3, %s207
      %s209 = smul.u32 8, %s19
      %v211 = vld [vmem:[%s198] sm:$0xf]
      %v212 = vld [vmem:[%s198 + $0x4] sm:$0xf]
      %v213 = vld [vmem:[%s198 + $0x8] sm:$0xf]
      %v214 = vld [vmem:[%s198 + $0xc] sm:$0xf]
      %v215 = vld [vmem:[%s198 + $0x10] sm:$0xf]
      %v216 = vld [vmem:[%s198 + $0x14] sm:$0xf]
      %v217 = vld [vmem:[%s198 + $0x18] sm:$0xf]
      %v218 = vld [vmem:[%s198 + $0x1c] sm:$0xf]
      %v219 = vld [vmem:[%s1] sm:$0xf]
      %v220 = vld [vmem:[%s1 + $0x4] sm:$0xf]
      %v221 = vld [vmem:[%s1 + $0x8] sm:$0xf]
      %v222 = vld [vmem:[%s1 + $0xc] sm:$0xf]
      %v223 = vld [vmem:[%s1 + $0x10] sm:$0x3]
      %v224 = vld [vmem:[%s2] sm:$0x1]
      %v226 = vlaneseq
      %v227 = vshrl.u32 %v226, 7
      %v228 = vsub.s32 0, %v227
      %v229 = vrot.slane %v224, %v228
      %v239 = vunpack.c.l.b16 %v211
      %v240 = vunpack.c.l.b16 %v212
      %v241 = vunpack.c.l.b16 %v213
      %v242 = vunpack.c.l.b16 %v214
      %v243 = vunpack.c.l.b16 %v215
      %v244 = vunpack.c.l.b16 %v216
      %v245 = vunpack.c.l.b16 %v217
      %v246 = vunpack.c.l.b16 %v218
      %v247 = vpack.c.b16 %v240, %v239
      %v248 = vpack.c.b16 %v242, %v241
      %v249 = vpack.c.b16 %v244, %v243
      %v250 = vpack.c.b16 %v246, %v245
      %v256 = vunpack.c.l.b16 %v219
      %v257 = vunpack.c.l.b16 %v220
      %v258 = vunpack.c.l.b16 %v221
      %v259 = vunpack.c.l.b16 %v222
      %v260 = vunpack.c.l.b16 %v223
      %v261 = vpack.c.b16 %v257, %v256
      %v262 = vpack.c.b16 %v259, %v258
      %v263 = vpack.c.b16 %v260, %v260
      %vm266 = vcmask 293888
      %v268 = vsel %vm266, %v247, 0
      %v271 = vsel %vm266, %v248, 0
      %v274 = vsel %vm266, %v249, 0
      %v277 = vsel %vm266, %v250, 0
      %vm279 = vcmask 1041408
      %v281 = vsel %vm279, %v263, 0
      %283 = vmatprep.subr.bf16.mxu0 0
      %284 = vmatpush1.bf16.msra.mxu0 %v261
      %285 = vmatprep.subr.bf16.mxu0 0
      %286 = vmatpush1.bf16.msra.mxu0 %v262
      %287 = vmatprep.subr.bf16.mxu0 0
      %288 = vmatpush1.bf16.msra.mxu0 %v281
      %289 = vmatprep.subr.bf16.mxu0 0
      %290 = vmatpush1.bf16.msra.mxu0 0
      %291 = vmatprep.subr.bf16.mxu0 0
      %292 = vmatpush1.bf16.msra.mxu0 0
      %293 = vmatprep.subr.bf16.mxu0 0
      %294 = vmatpush1.bf16.msra.mxu0 0
      %295 = vmatprep.subr.bf16.mxu0 0
      %296 = vmatpush1.bf16.msra.mxu0 0
      %297 = vmatprep.subr.bf16.mxu0 0
      %298 = vmatpush1.bf16.msra.mxu0 0
      %299 = vmatprep.subr.bf16.mxu0 0
      %300 = vmatpush1.bf16.msra.mxu0 0
      %301 = vmatprep.subr.bf16.mxu0 0
      %302 = vmatpush1.bf16.msra.mxu0 0
      %303 = vmatprep.subr.bf16.mxu0 0
      %304 = vmatpush1.bf16.msra.mxu0 0
      %305 = vmatprep.subr.bf16.mxu0 0
      %306 = vmatpush1.bf16.msra.mxu0 0
      %307 = vmatprep.subr.bf16.mxu0 0
      %308 = vmatpush1.bf16.msra.mxu0 0
      %309 = vmatprep.subr.bf16.mxu0 0
      %310 = vmatpush1.bf16.msra.mxu0 0
      %311 = vmatprep.subr.bf16.mxu0 0
      %312 = vmatpush1.bf16.msra.mxu0 0
      %313 = vmatprep.subr.bf16.mxu0 0
      %314 = vmatpush1.bf16.msra.mxu0 0
      %315 = vmatprep.mubr.bf16.mxu0 0
      %316 = vmatmul.mubr.bf16.gmra.mrb[0].mxu0 %v268
      %v317 = vpop.f32.mrb[0].mxu0
      %v318 = vadd.f32 %v229, %v317
      %v319 = vpop.f32.mrb[0].mxu0
      %v320 = vpop.f32.mrb[0].mxu0
      %v321 = vadd.f32 %v229, %v320
      %v322 = vpop.f32.mrb[0].mxu0
      %323 = vmatprep.mubr.bf16.mxu0 0
      %324 = vmatmul.mubr.bf16.gmra.mrb[0].mxu0 %v271
      %v325 = vpop.f32.mrb[0].mxu0
      %v326 = vadd.f32 %v229, %v325
      %v327 = vpop.f32.mrb[0].mxu0
      %v328 = vpop.f32.mrb[0].mxu0
      %v329 = vadd.f32 %v229, %v328
      %v330 = vpop.f32.mrb[0].mxu0
      %331 = vmatprep.mubr.bf16.mxu0 0
      %332 = vmatmul.mubr.bf16.gmra.mrb[0].mxu0 %v274
      %v333 = vpop.f32.mrb[0].mxu0
      %v334 = vadd.f32 %v229, %v333
      %v335 = vpop.f32.mrb[0].mxu0
      %v336 = vpop.f32.mrb[0].mxu0
      %v337 = vadd.f32 %v229, %v336
      %v338 = vpop.f32.mrb[0].mxu0
      %339 = vmatprep.mubr.bf16.mxu0 0
      %340 = vmatmul.mubr.bf16.gmra.mrb[0].mxu0 %v277
      %v341 = vpop.f32.mrb[0].mxu0
      %v342 = vadd.f32 %v229, %v341
      %v343 = vpop.f32.mrb[0].mxu0
      %v344 = vpop.f32.mrb[0].mxu0
      %v345 = vadd.f32 %v229, %v344
      %v346 = vpop.f32.mrb[0].mxu0
      %347 = vdwg.mxu0
      %348 = vst [vmem:[%s208] sm:$0xff] %v318
      %349 = vst [vmem:[%s208 + $0x8] sm:$0xff] %v321
      %350 = vst [vmem:[%s208 + $0x10] sm:$0xff] %v326
      %351 = vst [vmem:[%s208 + $0x18] sm:$0xff] %v329
      %352 = vst [vmem:[%s208 + $0x20] sm:$0xff] %v334
      %353 = vst [vmem:[%s208 + $0x28] sm:$0xff] %v337
      %354 = vst [vmem:[%s208 + $0x30] sm:$0xff] %v342
      %355 = vst [vmem:[%s208 + $0x38] sm:$0xff] %v345
      %s356 = smul.u32 8, %s19
      %p357 = scmp.lt.s32.totalorder %s18, 1
      %s358 = scalar_select %p357, %s18, 1
      %p359 = scmp.lt.s32.totalorder %s356, 7
      %s360 = scalar_select %p359, %s356, 7
      %s361 = smul.addr %s358, 8
      %s362 = sadd.s32 %s360, %s361
      %s363 = smul.addr %s362, 8
      %s364 = scalar_lea.vmem %s3, %s363
      // Predicated region
      $region33: #{numba_conv2d_forward.1} parent=31 // pred_check
        %p365 = pneg %p116
      $region34: #{numba_conv2d_forward.1} parent=31 // pred_check_branch
        %367 = sbr.rel (%p365) target = $region36
      $region35: #{numba_conv2d_forward.1} parent=31 // pred_region
        %s368 = smul.u32 8, %s19
      $region36: #{numba_conv2d_forward.1} parent=31 // pred_fallthru
        _
    $region32: #{numba_conv2d_forward.1} parent=5 // pred_fallthru
      _
    %p369 = scmp.le.s32.totalorder 2, %s9
    // Predicated region
    $region37: #{numba_conv2d_forward.1} parent=5 // pred_check
      %p370 = pneg %p369
    $region38: #{numba_conv2d_forward.1} parent=5 // pred_check_branch
      %372 = sbr.rel (%p370) target = $region40
    $region39: #{numba_conv2d_forward.1} parent=5 // pred_region
      %s373 = ssub.s32 %s9, 2
      // Predicated region
      $region41: #{numba_conv2d_forward.1} parent=39 // pred_check
        %p374 = pneg %p122
      $region42: #{numba_conv2d_forward.1} parent=39 // pred_check_branch
        %376 = sbr.rel (%p374) target = $region44
      $region43: #{numba_conv2d_forward.1} parent=39 // pred_region
        %s377 = smul.u32 8, %s21
        %p378 = scmp.lt.s32.totalorder %s20, 1
        %s379 = scalar_select %p378, %s20, 1
        %p380 = scmp.lt.s32.totalorder %s377, 7
        %s381 = scalar_select %p380, %s377, 7
        %s382 = smul.addr %s379, 8
        %s383 = sadd.s32 %s381, %s382
        %s384 = smul.addr %s383, 8
        %s385 = scalar_lea.vmem %s3, %s384
      $region44: #{numba_conv2d_forward.1} parent=39 // pred_fallthru
        _
    $region40: #{numba_conv2d_forward.1} parent=5 // pred_fallthru
      _
  $region6: #{numba_conv2d_forward.1} parent=0 // loop_footer
    %s13 = sadd.s32 1, %s9
  $region7: #{numba_conv2d_forward.1} parent=0 // loop_footer_branch
    %8 = sbr.rel target = $region3
  $region8: #{numba_conv2d_forward.1} parent=0 // loop_exit
    _

</llo_original>
